<compile_context>
chip_gen: v6e
topology: v6e:2x2x1
jax: 0.10.0
libtpu: 0.0.40
codegen_flags: <defaults>
</compile_context>

<pallas_src>
import jax
import jax.numpy as jnp
from jax.experimental import pallas as pl
from jax.experimental.pallas import tpu as pltpu


def _fedrec_mlp_kernel(items_t_ref, w0i_ref, b0f_ref, w1_ref, b1_ref,
                       w2_ref, b2_ref, out_ref):
    """One lane-tile of items through the 3-layer MLP in (features, items) form.

    items_t_ref : (dim, TL)  item embeddings, transposed (items on lane axis)
    w0i_ref     : (h0, dim)  item half of layer-0 weight (PyTorch (out, in))
    b0f_ref     : (h0, 1)    layer-0 bias with the constant user term folded in
    w1_ref      : (h1, h0)
    b1_ref      : (h1, 1)
    w2_ref      : (1, h1)
    b2_ref      : (1, 1)
    out_ref     : (1, TL)    lane-dense output row
    """
    # layer 0: W0_item @ X + (W0_user @ u + b0); relu   (f32 accumulation)
    v = jnp.dot(w0i_ref[...], items_t_ref[...],
                preferred_element_type=jnp.float32) + b0f_ref[...]
    v = jnp.maximum(v, 0.0)
    # layer 1: W1 @ v + b1; relu
    v = jnp.dot(w1_ref[...], v, preferred_element_type=jnp.float32) + b1_ref[...]
    v = jnp.maximum(v, 0.0)
    # layer 2 (last): W2 @ v + b2; sigmoid
    v = jnp.dot(w2_ref[...], v, preferred_element_type=jnp.float32) + b2_ref[...]
    out_ref[...] = jax.nn.sigmoid(v)


def fedrec_forward(user_emb, items_emb, linear_layers, train_items=None,
                   for_train=False, tile_lanes=512, items_dtype=None):
    """Pallas implementation of FedRecClient.forward.

    user_emb:      (1, dim) f32
    items_emb:     (m_item, dim) f32
    linear_layers: list of 3 (w, b), PyTorch nn.Linear layout (out, in), (out,)
    items_dtype:   optional narrower dtype (e.g. jnp.bfloat16) for the
                   HBM-bound item-embedding read; accumulation stays f32.
    returns:       1-D f32 vector, same as v.view(-1) in the reference.
    """
    if for_train:
        items_emb = items_emb[train_items]          # glue: gather stays in plain JAX

    n, dim = items_emb.shape
    (w0, b0), (w1, b1), (w2, b2) = linear_layers
    h0, h1, out_dim = w0.shape[0], w1.shape[0], w2.shape[0]

    # Fold the constant user contribution into the layer-0 bias:
    #   [u, x] @ W0.T + b0 == x @ W0_item.T + (u @ W0_user.T + b0)
    w0_user = w0[:, :dim]
    w0_item = w0[:, dim:]
    b0_fused = (w0_user @ user_emb.reshape(dim, 1)
                + b0.reshape(h0, 1)).astype(jnp.float32)
    b1c = b1.reshape(h1, 1).astype(jnp.float32)
    b2c = b2.reshape(out_dim, 1).astype(jnp.float32)
    w1c = w1.astype(jnp.float32)
    w2c = w2.astype(jnp.float32)

    if items_dtype is not None:                     # v6e/v7x: halve the HBM read
        items_emb = items_emb.astype(items_dtype)
        w0_item = w0_item.astype(items_dtype)
    else:
        w0_item = w0_item.astype(jnp.float32)

    # Items on the lane axis, padded to a multiple of 128 lanes; small item
    # counts collapse to a single 128-wide block (no grid loop overhead).
    tl = min(int(tile_lanes), pl.cdiv(n, 128) * 128)
    tl = pl.cdiv(tl, 128) * 128
    n_pad = pl.cdiv(n, tl) * tl
    items_t = jnp.zeros((dim, n_pad), items_emb.dtype).at[:, :n].set(items_emb.T)

    full = lambda a: pl.BlockSpec(a.shape, lambda i: (0, 0))

    flops = 2 * n_pad * (dim * h0 + h0 * h1 + h1 * out_dim)
    bytes_accessed = (items_t.size * items_t.dtype.itemsize
                      + n_pad * out_dim * 4
                      + w0_item.size * w0_item.dtype.itemsize
                      + (w1c.size + w2c.size + h0 + h1 + out_dim) * 4)
    cost = pl.CostEstimate(flops=flops,
                           transcendentals=n_pad * out_dim,
                           bytes_accessed=bytes_accessed)

    out = pl.pallas_call(
        _fedrec_mlp_kernel,
        out_shape=jax.ShapeDtypeStruct((out_dim, n_pad), jnp.float32),
        grid=(n_pad // tl,),
        in_specs=[
            pl.BlockSpec((dim, tl), lambda i: (0, i)),        # items tile (lanes)
            full(w0_item), full(b0_fused),
            full(w1c), full(b1c),
            full(w2c), full(b2c),
        ],
        out_specs=pl.BlockSpec((out_dim, tl), lambda i: (0, i)),
        compiler_params=pltpu.CompilerParams(
            dimension_semantics=("parallel",)),
        cost_estimate=cost,
    )(items_t, w0_item, b0_fused, w1c, b1c, w2c, b2c)

    return out[:, :n].reshape(-1)


def _reference_forward(user_emb, items_emb, linear_layers):
    """Pure-JAX reference mirroring the PyTorch code (for verification)."""
    n = items_emb.shape[0]
    user = jnp.broadcast_to(user_emb, (n, user_emb.shape[1]))
    v = jnp.concatenate([user, items_emb], axis=-1)
    last = len(linear_layers) - 1
    for i, (w, b) in enumerate(linear_layers):
        v = v @ w.T + b
        v = jax.nn.relu(v) if i < last else jax.nn.sigmoid(v)
    return v.reshape(-1)


if __name__ == "__main__":
    key = jax.random.PRNGKey(0)
    k_user, k_items, k0, k1, k2, k_tr = jax.random.split(key, 6)

    dim = 32          # self.dim
    m_item = 64       # self.m_item
    std = 0.01        # args.std

    # nn.Embedding(1, dim) with normal init (std=args.std)
    user_emb = std * jax.random.normal(k_user, (1, dim), dtype=jnp.float32)

    # items_emb passed into forward(): (m_item, dim)
    items_emb = jax.random.normal(k_items, (m_item, dim), dtype=jnp.float32)

    # linear_layers: [(2*dim -> 32), (32 -> 16), (16 -> 1)], PyTorch (out, in) layout
    def make_linear(k, out_d, in_d):
        kw, kb = jax.random.split(k)
        w = jax.random.normal(kw, (out_d, in_d), dtype=jnp.float32) / jnp.sqrt(in_d)
        b = 0.01 * jax.random.normal(kb, (out_d,), dtype=jnp.float32)
        return w, b

    linear_layers = [
        make_linear(k0, 32, 2 * dim),
        make_linear(k1, 16, 32),
        make_linear(k2, 1, 16),
    ]

    # ---- eval-style forward over all items (single 128-lane block) ----
    rating = fedrec_forward(user_emb, items_emb, linear_layers)
    rating = jax.block_until_ready(rating)

    # ---- train-style forward over sampled (pos + neg) items ----
    # TODO(synk): the np.random negative-sampling loop / BCE training step are
    # host-side data prep + autograd, not kernel work; only the index gather is kept.
    train_items = jax.random.randint(k_tr, (16,), 0, m_item)      # 4 pos * (1 + 3 neg)
    preds = fedrec_forward(user_emb, items_emb, linear_layers,
                           train_items=train_items, for_train=True)
    preds = jax.block_until_ready(preds)

    # ---- bf16 item-embedding read (v6e/v7x memory-roofline lever) ----
    rating_bf16 = fedrec_forward(user_emb, items_emb, linear_layers,
                                 items_dtype=jnp.bfloat16)
    rating_bf16 = jax.block_until_ready(rating_bf16)

    # verify against pure-JAX reference
    ref_rating = _reference_forward(user_emb, items_emb, linear_layers)
    ref_preds = _reference_forward(user_emb, items_emb[train_items], linear_layers)
    assert rating.shape == (m_item,) and preds.shape == (16,)
    assert jnp.allclose(rating, ref_rating, atol=1e-5, rtol=1e-5)
    assert jnp.allclose(preds, ref_preds, atol=1e-5, rtol=1e-5)
    assert jnp.allclose(rating_bf16, ref_rating, atol=5e-2, rtol=5e-2)

    print("KERNEL_OK")
</pallas_src>

<mosaic_0001>
module attributes {stable_mosaic.version = 11 : i64} {
  func.func @_fedrec_mlp_kernel(%arg0: i32, %arg1: memref<32x128xf32, #tpu.memory_space<vmem>>, %arg2: memref<32x32xf32, #tpu.memory_space<vmem>>, %arg3: memref<32x1xf32, #tpu.memory_space<vmem>>, %arg4: memref<16x32xf32, #tpu.memory_space<vmem>>, %arg5: memref<16x1xf32, #tpu.memory_space<vmem>>, %arg6: memref<1x16xf32, #tpu.memory_space<vmem>>, %arg7: memref<1x1xf32, #tpu.memory_space<vmem>>, %arg8: memref<1x128xf32, #tpu.memory_space<vmem>>) attributes {dimension_semantics = [#tpu.dimension_semantics<parallel>], iteration_bounds = array<i64: 1>, scalar_prefetch = 0 : i64, scratch_operands = 0 : i64, tpu.core_type = #tpu.core_type<tc>, window_params = [{transform_indices = @transform_0, window_bounds = array<i64: 32, 128>}, {pipeline_mode = #tpu.pipeline_mode<synchronous>, transform_indices = @transform_1, window_bounds = array<i64: 32, 32>}, {pipeline_mode = #tpu.pipeline_mode<synchronous>, transform_indices = @transform_2, window_bounds = array<i64: 32, 1>}, {pipeline_mode = #tpu.pipeline_mode<synchronous>, transform_indices = @transform_3, window_bounds = array<i64: 16, 32>}, {pipeline_mode = #tpu.pipeline_mode<synchronous>, transform_indices = @transform_4, window_bounds = array<i64: 16, 1>}, {pipeline_mode = #tpu.pipeline_mode<synchronous>, transform_indices = @transform_5, window_bounds = array<i64: 1, 16>}, {pipeline_mode = #tpu.pipeline_mode<synchronous>, transform_indices = @transform_6, window_bounds = array<i64: 1, 1>}, {transform_indices = @transform_7, window_bounds = array<i64: 1, 128>}]} {
    %c0 = arith.constant 0 : index
    %c0_0 = arith.constant 0 : index
    %0 = vector.load %arg2[%c0, %c0_0] : memref<32x32xf32, #tpu.memory_space<vmem>>, vector<32x32xf32>
    %c0_1 = arith.constant 0 : index
    %c0_2 = arith.constant 0 : index
    %1 = vector.load %arg1[%c0_1, %c0_2] : memref<32x128xf32, #tpu.memory_space<vmem>>, vector<32x128xf32>
    %cst = arith.constant dense<0.000000e+00> : vector<32x128xf32>
    %2 = tpu.matmul %0, %1, %cst {dimension_numbers = #tpu.dot_dimension_numbers<[1], [0], [0], [1], [0, 0, 1, 1], [], []>} : vector<32x32xf32>, vector<32x128xf32>, vector<32x128xf32> -> vector<32x128xf32>
    %c0_3 = arith.constant 0 : index
    %c0_4 = arith.constant 0 : index
    %3 = vector.load %arg3[%c0_3, %c0_4] : memref<32x1xf32, #tpu.memory_space<vmem>>, vector<32x1xf32>
    %4 = vector.broadcast %3 : vector<32x1xf32> to vector<32x128xf32>
    %5 = arith.addf %2, %4 : vector<32x128xf32>
    %cst_5 = arith.constant 0.000000e+00 : f32
    %6 = vector.broadcast %cst_5 : f32 to vector<32x128xf32>
    %7 = arith.maximumf %5, %6 : vector<32x128xf32>
    %c0_6 = arith.constant 0 : index
    %c0_7 = arith.constant 0 : index
    %8 = vector.load %arg4[%c0_6, %c0_7] : memref<16x32xf32, #tpu.memory_space<vmem>>, vector<16x32xf32>
    %cst_8 = arith.constant dense<0.000000e+00> : vector<16x128xf32>
    %9 = tpu.matmul %8, %7, %cst_8 {dimension_numbers = #tpu.dot_dimension_numbers<[1], [0], [0], [1], [0, 0, 1, 1], [], []>} : vector<16x32xf32>, vector<32x128xf32>, vector<16x128xf32> -> vector<16x128xf32>
    %c0_9 = arith.constant 0 : index
    %c0_10 = arith.constant 0 : index
    %10 = vector.load %arg5[%c0_9, %c0_10] : memref<16x1xf32, #tpu.memory_space<vmem>>, vector<16x1xf32>
    %11 = vector.broadcast %10 : vector<16x1xf32> to vector<16x128xf32>
    %12 = arith.addf %9, %11 : vector<16x128xf32>
    %cst_11 = arith.constant 0.000000e+00 : f32
    %13 = vector.broadcast %cst_11 : f32 to vector<16x128xf32>
    %14 = arith.maximumf %12, %13 : vector<16x128xf32>
    %c0_12 = arith.constant 0 : index
    %c0_13 = arith.constant 0 : index
    %15 = vector.load %arg6[%c0_12, %c0_13] : memref<1x16xf32, #tpu.memory_space<vmem>>, vector<1x16xf32>
    %cst_14 = arith.constant dense<0.000000e+00> : vector<1x128xf32>
    %16 = tpu.matmul %15, %14, %cst_14 {dimension_numbers = #tpu.dot_dimension_numbers<[1], [0], [0], [1], [0, 0, 1, 1], [], []>} : vector<1x16xf32>, vector<16x128xf32>, vector<1x128xf32> -> vector<1x128xf32>
    %c0_15 = arith.constant 0 : index
    %c0_16 = arith.constant 0 : index
    %17 = vector.load %arg7[%c0_15, %c0_16] : memref<1x1xf32, #tpu.memory_space<vmem>>, vector<1x1xf32>
    %18 = vector.broadcast %17 : vector<1x1xf32> to vector<1x128xf32>
    %19 = arith.addf %16, %18 : vector<1x128xf32>
    %20 = arith.negf %19 : vector<1x128xf32>
    %21 = math.exp %20 : vector<1x128xf32>
    %cst_17 = arith.constant 1.000000e+00 : f32
    %22 = vector.broadcast %cst_17 : f32 to vector<1x128xf32>
    %23 = arith.addf %22, %21 : vector<1x128xf32>
    %24 = arith.divf %22, %23 : vector<1x128xf32>
    %c0_18 = arith.constant 0 : index
    %c0_19 = arith.constant 0 : index
    %25 = vector.load %arg8[%c0_18, %c0_19] : memref<1x128xf32, #tpu.memory_space<vmem>>, vector<1x128xf32>
    tpu.vector_store %arg8[%c0_18, %c0_19], %24 {strides = array<i32>} : memref<1x128xf32, #tpu.memory_space<vmem>>, vector<1x128xf32>,
    return
  }
  func.func @transform_0(%arg0: i32) -> (i32, i32) {
    %c0_i32 = arith.constant 0 : i32
    %c0_i32_0 = arith.constant 0 : i32
    return %c0_i32, %arg0 : i32, i32
  }
  func.func @transform_1(%arg0: i32) -> (i32, i32) {
    %c0_i32 = arith.constant 0 : i32
    %c0_i32_0 = arith.constant 0 : i32
    %c0_i32_1 = arith.constant 0 : i32
    return %c0_i32, %c0_i32_0 : i32, i32
  }
  func.func @transform_2(%arg0: i32) -> (i32, i32) {
    %c0_i32 = arith.constant 0 : i32
    %c0_i32_0 = arith.constant 0 : i32
    %c0_i32_1 = arith.constant 0 : i32
    return %c0_i32, %c0_i32_0 : i32, i32
  }
  func.func @transform_3(%arg0: i32) -> (i32, i32) {
    %c0_i32 = arith.constant 0 : i32
    %c0_i32_0 = arith.constant 0 : i32
    %c0_i32_1 = arith.constant 0 : i32
    return %c0_i32, %c0_i32_0 : i32, i32
  }
  func.func @transform_4(%arg0: i32) -> (i32, i32) {
    %c0_i32 = arith.constant 0 : i32
    %c0_i32_0 = arith.constant 0 : i32
    %c0_i32_1 = arith.constant 0 : i32
    return %c0_i32, %c0_i32_0 : i32, i32
  }
  func.func @transform_5(%arg0: i32) -> (i32, i32) {
    %c0_i32 = arith.constant 0 : i32
    %c0_i32_0 = arith.constant 0 : i32
    %c0_i32_1 = arith.constant 0 : i32
    return %c0_i32, %c0_i32_0 : i32, i32
  }
  func.func @transform_6(%arg0: i32) -> (i32, i32) {
    %c0_i32 = arith.constant 0 : i32
    %c0_i32_0 = arith.constant 0 : i32
    %c0_i32_1 = arith.constant 0 : i32
    return %c0_i32, %c0_i32_0 : i32, i32
  }
  func.func @transform_7(%arg0: i32) -> (i32, i32) {
    %c0_i32 = arith.constant 0 : i32
    %c0_i32_0 = arith.constant 0 : i32
    return %c0_i32, %arg0 : i32, i32
  }
}

</mosaic_0001>

<llo_original>
// kernel: tpu_custom_call.1
$region0: #{tpu_custom_call.1}
  #allocation0 [shape = 'u32[]', space=smem, size = 0x4, offset = 0x4, fixed_abs, tag = 'smem constant byte address 0x4 - core index']
  #allocation1 [shape = 'u32[144,128]{1,0:T(1,128)}', space=vmem, size = 0x12000, scoped, tag = 'internal scratch']
  #allocation2 [shape = 'f32[1,1]{1,0:T(1,128)S(1)}', space=vmem, size = 0x200, scoped, tag = 'scoped memory for tpu_custom_call.1']
  %s0 = inlined_call_operand.vmem [shape: f32[32,128], index: 0, kind: input, shape index: {}]
  %s1 = inlined_call_operand.hbm [shape: f32[32,32], index: 1, kind: input, shape index: {}]
  %s2 = inlined_call_operand.vmem [shape: f32[32,1], index: 2, kind: input, shape index: {}]
  %s3 = inlined_call_operand.vmem [shape: f32[16,32], index: 3, kind: input, shape index: {}]
  %s4 = inlined_call_operand.vmem [shape: f32[16,1], index: 4, kind: input, shape index: {}]
  %s5 = inlined_call_operand.vmem [shape: f32[1,16], index: 5, kind: input, shape index: {}]
  %s6 = inlined_call_operand.<no memory space> [shape: f32[1,1], index: 6, kind: input, shape index: {}]
  %s7 = inlined_call_operand.hbm [shape: f32[1,128], index: 7, kind: output, shape index: {}]
  %s8 = sld [smem:[#allocation0]]
  $region42: #{tpu_custom_call.1} parent=0
    _
  %s10 = ssub.s32 1, %s8
  %s11 = scalar_select 0, %s10, %s8
  %v12 = vstv %s6
  %13 = vst [vmem:[#allocation2] sm:$0x1] %v12
  $region1: #{tpu_custom_call.1} parent=0
    #allocation3 [shape = 'u8[16384]{0}', space=vmem, size = 0x4000, scoped, tag = 'input window, operand 1, single buffered']
    #allocation4 [shape = 's32[1]{0}', space=sflag, size = 0x4, scoped, tag = 'scoped memory for tpu_custom_call.1']
    #allocation5 [shape = 's32[1]{0}', space=sflag, size = 0x4, scoped, tag = 'scoped memory for tpu_custom_call.1']
    #allocation6 [shape = 'u8[512]{0}', space=vmem, size = 0x400, scoped, tag = 'output window, operand 0, single buffered']
    %14 = vsyncpa [#allocation4], 0
    %15 = vsyncpa [#allocation5], 0
    // Predicated region
    $region2: #{tpu_custom_call.1} parent=1 // pred_check
      _
    $region3: #{tpu_custom_call.1} parent=1 // pred_check_branch
      %17 = sbr.rel (0) target = $region5
    $region4: #{tpu_custom_call.1} parent=1 // pred_region
      _
    $region5: #{tpu_custom_call.1} parent=1 // pred_fallthru
      _
    // Predicated region
    $region6: #{tpu_custom_call.1} parent=1 // pred_check
      _
    $region7: #{tpu_custom_call.1} parent=1 // pred_check_branch
      %19 = sbr.rel (0) target = $region9
    $region8: #{tpu_custom_call.1} parent=1 // pred_region
      %s21 = ssub.s32 512, 512
      %22 = vsyncadd [#allocation4], %s21
      %s23 = sshll.u32 [#allocation3], 4
      %s24 = int_to_ptr.vmem [resolvable:$true] %s23
      %29 = dma.hbm_to_vmem [thread:$0]  %s1, 512, %s24, [#allocation4], 128, 128, 8
    $region9: #{tpu_custom_call.1} parent=1 // pred_fallthru
      _
    // Predicated region
    $region10: #{tpu_custom_call.1} parent=1 // pred_check
      _
    $region11: #{tpu_custom_call.1} parent=1 // pred_check_branch
      %31 = sbr.rel (0) target = $region13
    $region12: #{tpu_custom_call.1} parent=1 // pred_region
      _
    $region13: #{tpu_custom_call.1} parent=1 // pred_fallthru
      _
    // Predicated region
    $region14: #{tpu_custom_call.1} parent=1 // pred_check
      _
    $region15: #{tpu_custom_call.1} parent=1 // pred_check_branch
      %33 = sbr.rel (0) target = $region17
    $region16: #{tpu_custom_call.1} parent=1 // pred_region
      _
    $region17: #{tpu_custom_call.1} parent=1 // pred_fallthru
      _
    // Predicated region
    $region18: #{tpu_custom_call.1} parent=1 // pred_check
      _
    $region19: #{tpu_custom_call.1} parent=1 // pred_check_branch
      %35 = sbr.rel (0) target = $region21
    $region20: #{tpu_custom_call.1} parent=1 // pred_region
      _
    $region21: #{tpu_custom_call.1} parent=1 // pred_fallthru
      _
    // Predicated region
    $region22: #{tpu_custom_call.1} parent=1 // pred_check
      _
    $region23: #{tpu_custom_call.1} parent=1 // pred_check_branch
      %37 = sbr.rel (0) target = $region25
    $region24: #{tpu_custom_call.1} parent=1 // pred_region
      _
    $region25: #{tpu_custom_call.1} parent=1 // pred_fallthru
      _
    // Predicated region
    $region26: #{tpu_custom_call.1} parent=1 // pred_check
      _
    $region27: #{tpu_custom_call.1} parent=1 // pred_check_branch
      %39 = sbr.rel (0) target = $region29
    $region28: #{tpu_custom_call.1} parent=1 // pred_region
      _
    $region29: #{tpu_custom_call.1} parent=1 // pred_fallthru
      _
    // Predicated region
    $region30: #{tpu_custom_call.1} parent=1 // pred_check
      _
    $region31: #{tpu_custom_call.1} parent=1 // pred_check_branch
      %41 = sbr.rel (0) target = $region33
    $region32: #{tpu_custom_call.1} parent=1 // pred_region
      %42 = dma.done [#allocation4], 512
    $region33: #{tpu_custom_call.1} parent=1 // pred_fallthru
      _
    %v43 = vld [vmem:[#allocation3] sm:$0xff]
    %v44 = vld [vmem:[#allocation3 + $0x8] sm:$0xff]
    %v45 = vld [vmem:[#allocation3 + $0x10] sm:$0xff]
    %v46 = vld [vmem:[#allocation3 + $0x18] sm:$0xff]
    %v47 = vld [vmem:[%s0] sm:$0xff]
    %v48 = vld [vmem:[%s0 + $0x8] sm:$0xff]
    %v49 = vld [vmem:[%s0 + $0x10] sm:$0xff]
    %v50 = vld [vmem:[%s0 + $0x18] sm:$0xff]
    %v51 = vld [vmem:[%s2] sm:$0xff]
    %v52 = vld [vmem:[%s2 + $0x8] sm:$0xff]
    %v53 = vld [vmem:[%s2 + $0x10] sm:$0xff]
    %v54 = vld [vmem:[%s2 + $0x18] sm:$0xff]
    %56 = vset.pattern.permute.xlu0 0
    %57 = vperm.xlu0 %56, %v51
    %v58 = vpop.permute.xlu0 %57
    %61 = vset.pattern.permute.xlu0 0
    %62 = vperm.xlu0 %61, %v52
    %v63 = vpop.permute.xlu0 %62
    %66 = vset.pattern.permute.xlu0 0
    %67 = vperm.xlu0 %66, %v53
    %v68 = vpop.permute.xlu0 %67
    %71 = vset.pattern.permute.xlu0 0
    %72 = vperm.xlu0 %71, %v54
    %v73 = vpop.permute.xlu0 %72
    %vm75 = vcmask 261120
    %v77 = vsel %vm75, %v43, 0
    %v80 = vsel %vm75, %v44, 0
    %v83 = vsel %vm75, %v45, 0
    %v86 = vsel %vm75, %v46, 0
    %88 = vmatprep.subr.mxu0 0.0
    %89 = vmatpush1.msra.mxu0 0.0
    %90 = vmatprep.subr.mxu0 0.0
    %91 = vmatpush1.msra.mxu0 0.0
    %92 = vmatprep.subr.mxu0 0.0
    %93 = vmatpush1.msra.mxu0 0.0
    %94 = vmatprep.subr.mxu0 0.0
    %95 = vmatpush1.msra.mxu0 0.0
    %96 = vmatprep.subr.mxu0 0.0
    %97 = vmatpush1.msra.mxu0 0.0
    %98 = vmatprep.subr.mxu0 0.0
    %99 = vmatpush1.msra.mxu0 0.0
    %100 = vmatprep.subr.mxu0 0.0
    %101 = vmatpush1.msra.mxu0 0.0
    %102 = vmatprep.subr.mxu0 0.0
    %103 = vmatpush1.msra.mxu0 0.0
    %104 = vmatprep.subr.mxu0 0.0
    %105 = vmatpush1.msra.mxu0 0.0
    %106 = vmatprep.subr.mxu0 0.0
    %107 = vmatpush1.msra.mxu0 0.0
    %108 = vmatprep.subr.mxu0 0.0
    %109 = vmatpush1.msra.mxu0 0.0
    %110 = vmatprep.subr.mxu0 0.0
    %111 = vmatpush1.msra.mxu0 0.0
    %112 = vmatprep.subr.mxu0 0.0
    %113 = vmatpush1.msra.mxu0 %v50
    %114 = vmatprep.subr.mxu0 0.0
    %115 = vmatpush1.msra.mxu0 %v49
    %116 = vmatprep.subr.mxu0 0.0
    %117 = vmatpush1.msra.mxu0 %v48
    %118 = vmatprep.subr.mxu0 0.0
    %119 = vmatpush1.msra.mxu0 %v47
    %120 = vmatprep.subr.mxu0 0.0
    %121 = vmatpush2.msra.mxu0 0.0
    %122 = vmatprep.subr.mxu0 0.0
    %123 = vmatpush2.msra.mxu0 0.0
    %124 = vmatprep.subr.mxu0 0.0
    %125 = vmatpush2.msra.mxu0 0.0
    %126 = vmatprep.subr.mxu0 0.0
    %127 = vmatpush2.msra.mxu0 0.0
    %128 = vmatprep.subr.mxu0 0.0
    %129 = vmatpush2.msra.mxu0 0.0
    %130 = vmatprep.subr.mxu0 0.0
    %131 = vmatpush2.msra.mxu0 0.0
    %132 = vmatprep.subr.mxu0 0.0
    %133 = vmatpush2.msra.mxu0 0.0
    %134 = vmatprep.subr.mxu0 0.0
    %135 = vmatpush2.msra.mxu0 0.0
    %136 = vmatprep.subr.mxu0 0.0
    %137 = vmatpush2.msra.mxu0 0.0
    %138 = vmatprep.subr.mxu0 0.0
    %139 = vmatpush2.msra.mxu0 0.0
    %140 = vmatprep.subr.mxu0 0.0
    %141 = vmatpush2.msra.mxu0 0.0
    %142 = vmatprep.subr.mxu0 0.0
    %143 = vmatpush2.msra.mxu0 0.0
    %144 = vmatprep.subr.mxu0 0.0
    %145 = vmatpush2.msra.mxu0 0.0
    %146 = vmatprep.subr.mxu0 0.0
    %147 = vmatpush2.msra.mxu0 0.0
    %148 = vmatprep.subr.mxu0 0.0
    %149 = vmatpush2.msra.mxu0 0.0
    %150 = vmatprep.subr.mxu0 0.0
    %151 = vmatpush2.msra.mxu0 0.0
    %152 = vmatprep.mubr.f32.mxu0 0.0
    %153 = vmatmul.mubr.f32.gmra.mxu0 %v77
    %v154 = vpop.f32.mrf.mxu0
    %v155 = vadd.f32 %v58, %v154
    %v156 = vpop.f32.mrf.mxu0
    %157 = vmatprep.mubr.f32.mxu0 0.0
    %158 = vmatmul.mubr.f32.gmra.mxu0 %v80
    %v159 = vpop.f32.mrf.mxu0
    %v160 = vadd.f32 %v63, %v159
    %v161 = vpop.f32.mrf.mxu0
    %162 = vmatprep.mubr.f32.mxu0 0.0
    %163 = vmatmul.mubr.f32.gmra.mxu0 %v83
    %v164 = vpop.f32.mrf.mxu0
    %v165 = vadd.f32 %v68, %v164
    %v166 = vpop.f32.mrf.mxu0
    %167 = vmatprep.mubr.f32.mxu0 0.0
    %168 = vmatmul.mubr.f32.gmra.mxu0 %v86
    %v169 = vpop.f32.mrf.mxu0
    %v170 = vadd.f32 %v73, %v169
    %v171 = vpop.f32.mrf.mxu0
    %172 = vdwg.mxu0
    %v173 = vmax.f32 %v155, 0.0
    %v174 = vmax.f32 %v160, 0.0
    %v175 = vmax.f32 %v165, 0.0
    %v176 = vmax.f32 %v170, 0.0
    %v177 = vld [vmem:[%s3] sm:$0xff]
    %v178 = vld [vmem:[%s3 + $0x8] sm:$0xff]
    %v179 = vld [vmem:[%s4] sm:$0xff]
    %v180 = vld [vmem:[%s4 + $0x8] sm:$0xff]
    %182 = vset.pattern.permute.xlu0 0
    %183 = vperm.xlu0 %182, %v179
    %v184 = vpop.permute.xlu0 %183
    %187 = vset.pattern.permute.xlu0 0
    %188 = vperm.xlu0 %187, %v180
    %v189 = vpop.permute.xlu0 %188
    %v192 = vsel %vm75, %v177, 0
    %v195 = vsel %vm75, %v178, 0
    %197 = vmatprep.subr.mxu0 0.0
    %198 = vmatpush1.msra.mxu0 0.0
    %199 = vmatprep.subr.mxu0 0.0
    %200 = vmatpush1.msra.mxu0 0.0
    %201 = vmatprep.subr.mxu0 0.0
    %202 = vmatpush1.msra.mxu0 0.0
    %203 = vmatprep.subr.mxu0 0.0
    %204 = vmatpush1.msra.mxu0 0.0
    %205 = vmatprep.subr.mxu0 0.0
    %206 = vmatpush1.msra.mxu0 0.0
    %207 = vmatprep.subr.mxu0 0.0
    %208 = vmatpush1.msra.mxu0 0.0
    %209 = vmatprep.subr.mxu0 0.0
    %210 = vmatpush1.msra.mxu0 0.0
    %211 = vmatprep.subr.mxu0 0.0
    %212 = vmatpush1.msra.mxu0 0.0
    %213 = vmatprep.subr.mxu0 0.0
    %214 = vmatpush1.msra.mxu0 0.0
    %215 = vmatprep.subr.mxu0 0.0
    %216 = vmatpush1.msra.mxu0 0.0
    %217 = vmatprep.subr.mxu0 0.0
    %218 = vmatpush1.msra.mxu0 0.0
    %219 = vmatprep.subr.mxu0 0.0
    %220 = vmatpush1.msra.mxu0 0.0
    %221 = vmatprep.subr.mxu0 0.0
    %222 = vmatpush1.msra.mxu0 %v176
    %223 = vmatprep.subr.mxu0 0.0
    %224 = vmatpush1.msra.mxu0 %v175
    %225 = vmatprep.subr.mxu0 0.0
    %226 = vmatpush1.msra.mxu0 %v174
    %227 = vmatprep.subr.mxu0 0.0
    %228 = vmatpush1.msra.mxu0 %v173
    %229 = vmatprep.subr.mxu0 0.0
    %230 = vmatpush2.msra.mxu0 0.0
    %231 = vmatprep.subr.mxu0 0.0
    %232 = vmatpush2.msra.mxu0 0.0
    %233 = vmatprep.subr.mxu0 0.0
    %234 = vmatpush2.msra.mxu0 0.0
    %235 = vmatprep.subr.mxu0 0.0
    %236 = vmatpush2.msra.mxu0 0.0
    %237 = vmatprep.subr.mxu0 0.0
    %238 = vmatpush2.msra.mxu0 0.0
    %239 = vmatprep.subr.mxu0 0.0
    %240 = vmatpush2.msra.mxu0 0.0
    %241 = vmatprep.subr.mxu0 0.0
    %242 = vmatpush2.msra.mxu0 0.0
    %243 = vmatprep.subr.mxu0 0.0
    %244 = vmatpush2.msra.mxu0 0.0
    %245 = vmatprep.subr.mxu0 0.0
    %246 = vmatpush2.msra.mxu0 0.0
    %247 = vmatprep.subr.mxu0 0.0
    %248 = vmatpush2.msra.mxu0 0.0
    %249 = vmatprep.subr.mxu0 0.0
    %250 = vmatpush2.msra.mxu0 0.0
    %251 = vmatprep.subr.mxu0 0.0
    %252 = vmatpush2.msra.mxu0 0.0
    %253 = vmatprep.subr.mxu0 0.0
    %254 = vmatpush2.msra.mxu0 0.0
    %255 = vmatprep.subr.mxu0 0.0
    %256 = vmatpush2.msra.mxu0 0.0
    %257 = vmatprep.subr.mxu0 0.0
    %258 = vmatpush2.msra.mxu0 0.0
    %259 = vmatprep.subr.mxu0 0.0
    %260 = vmatpush2.msra.mxu0 0.0
    %261 = vmatprep.mubr.f32.mxu0 0.0
    %262 = vmatmul.mubr.f32.gmra.mxu0 %v192
    %v263 = vpop.f32.mrf.mxu0
    %v264 = vadd.f32 %v184, %v263
    %v265 = vpop.f32.mrf.mxu0
    %266 = vmatprep.mubr.f32.mxu0 0.0
    %267 = vmatmul.mubr.f32.gmra.mxu0 %v195
    %v268 = vpop.f32.mrf.mxu0
    %v269 = vadd.f32 %v189, %v268
    %v270 = vpop.f32.mrf.mxu0
    %271 = vdwg.mxu0
    %v272 = vmax.f32 %v264, 0.0
    %v273 = vmax.f32 %v269, 0.0
    %v274 = vld [vmem:[%s5] sm:$0x1]
    %v275 = vld [vmem:[#allocation2] sm:$0x1]
    %277 = vset.pattern.permute.xlu0 0
    %278 = vperm.xlu0 %277, %v275
    %v279 = vpop.permute.xlu0 %278
    %v281 = vlaneseq
    %v282 = vshrl.u32 %v281, 7
    %v283 = vsub.s32 0, %v282
    %v284 = vrot.slane %v279, %v283
    %vm285 = vcmask 130048
    %v287 = vsel %vm285, %v274, 0
    %289 = vmatprep.subr.mxu0 0.0
    %290 = vmatpush1.msra.mxu0 0.0
    %291 = vmatprep.subr.mxu0 0.0
    %292 = vmatpush1.msra.mxu0 0.0
    %293 = vmatprep.subr.mxu0 0.0
    %294 = vmatpush1.msra.mxu0 0.0
    %295 = vmatprep.subr.mxu0 0.0
    %296 = vmatpush1.msra.mxu0 0.0
    %297 = vmatprep.subr.mxu0 0.0
    %298 = vmatpush1.msra.mxu0 0.0
    %299 = vmatprep.subr.mxu0 0.0
    %300 = vmatpush1.msra.mxu0 0.0
    %301 = vmatprep.subr.mxu0 0.0
    %302 = vmatpush1.msra.mxu0 0.0
    %303 = vmatprep.subr.mxu0 0.0
    %304 = vmatpush1.msra.mxu0 0.0
    %305 = vmatprep.subr.mxu0 0.0
    %306 = vmatpush1.msra.mxu0 0.0
    %307 = vmatprep.subr.mxu0 0.0
    %308 = vmatpush1.msra.mxu0 0.0
    %309 = vmatprep.subr.mxu0 0.0
    %310 = vmatpush1.msra.mxu0 0.0
    %311 = vmatprep.subr.mxu0 0.0
    %312 = vmatpush1.msra.mxu0 0.0
    %313 = vmatprep.subr.mxu0 0.0
    %314 = vmatpush1.msra.mxu0 0.0
    %315 = vmatprep.subr.mxu0 0.0
    %316 = vmatpush1.msra.mxu0 0.0
    %317 = vmatprep.subr.mxu0 0.0
    %318 = vmatpush1.msra.mxu0 %v273
    %319 = vmatprep.subr.mxu0 0.0
    %320 = vmatpush1.msra.mxu0 %v272
    %321 = vmatprep.subr.mxu0 0.0
    %322 = vmatpush2.msra.mxu0 0.0
    %323 = vmatprep.subr.mxu0 0.0
    %324 = vmatpush2.msra.mxu0 0.0
    %325 = vmatprep.subr.mxu0 0.0
    %326 = vmatpush2.msra.mxu0 0.0
    %327 = vmatprep.subr.mxu0 0.0
    %328 = vmatpush2.msra.mxu0 0.0
    %329 = vmatprep.subr.mxu0 0.0
    %330 = vmatpush2.msra.mxu0 0.0
    %331 = vmatprep.subr.mxu0 0.0
    %332 = vmatpush2.msra.mxu0 0.0
    %333 = vmatprep.subr.mxu0 0.0
    %334 = vmatpush2.msra.mxu0 0.0
    %335 = vmatprep.subr.mxu0 0.0
    %336 = vmatpush2.msra.mxu0 0.0
    %337 = vmatprep.subr.mxu0 0.0
    %338 = vmatpush2.msra.mxu0 0.0
    %339 = vmatprep.subr.mxu0 0.0
    %340 = vmatpush2.msra.mxu0 0.0
    %341 = vmatprep.subr.mxu0 0.0
    %342 = vmatpush2.msra.mxu0 0.0
    %343 = vmatprep.subr.mxu0 0.0
    %344 = vmatpush2.msra.mxu0 0.0
    %345 = vmatprep.subr.mxu0 0.0
    %346 = vmatpush2.msra.mxu0 0.0
    %347 = vmatprep.subr.mxu0 0.0
    %348 = vmatpush2.msra.mxu0 0.0
    %349 = vmatprep.subr.mxu0 0.0
    %350 = vmatpush2.msra.mxu0 0.0
    %351 = vmatprep.subr.mxu0 0.0
    %352 = vmatpush2.msra.mxu0 0.0
    %353 = vmatprep.mubr.f32.mxu0 0.0
    %354 = vmatmul.mubr.f32.gmra.mxu0 %v287
    %v355 = vpop.f32.mrf.mxu0
    %v356 = vadd.f32 %v284, %v355
    %v357 = vpop.f32.mrf.mxu0
    %358 = vdwg.mxu0
    %v359 = vxor.u32 %v356, 2147483648
    %v360 = vmul.f32 %v359, 1.442695
    %v361 = vpow.pop %v360
    %v362 = vadd.f32 %v361, 1.0
    %v363 = vrcp.pop %v362
    %v364 = vmul.f32 1.0, %v363
    %365 = vst [vmem:[#allocation6] sm:$0x1] %v364
    // Predicated region
    $region34: #{tpu_custom_call.1} parent=1 // pred_check
      _
    $region35: #{tpu_custom_call.1} parent=1 // pred_check_branch
      %367 = sbr.rel (0) target = $region37
    $region36: #{tpu_custom_call.1} parent=1 // pred_region
      %s369 = ssub.s32 16, 16
      %370 = vsyncadd [#allocation5], %s369
      %s372 = sshll.u32 [#allocation6], 4
      %s373 = int_to_ptr.vmem [resolvable:$true] %s372
      %375 = dma.vmem_to_hbm [thread:$0]  %s373, 16, %s7, [#allocation5]
    $region37: #{tpu_custom_call.1} parent=1 // pred_fallthru
      _
    // Predicated region
    $region38: #{tpu_custom_call.1} parent=1 // pred_check
      _
    $region39: #{tpu_custom_call.1} parent=1 // pred_check_branch
      %377 = sbr.rel (0) target = $region41
    $region40: #{tpu_custom_call.1} parent=1 // pred_region
      %378 = dma.done [#allocation5], 16
    $region41: #{tpu_custom_call.1} parent=1 // pred_fallthru
      _
    %379 = vsyncpa [#allocation4], 1
    %380 = vsyncpa [#allocation5], 1

</llo_original>
